<compile_context>
chip_gen: v7x
topology: tpu7x:2x2x1
jax: 0.10.0
libtpu: 0.0.40
codegen_flags: <defaults>
</compile_context>

<pallas_src>
import functools
import math

import jax
import jax.numpy as jnp
from jax import lax
from jax.experimental import pallas as pl
from jax.experimental.pallas import tpu as pltpu


def _pick_tile(b, *, prefer_split=False):
    """Largest of (512, 256, 128) dividing b.

    With prefer_split=True, also require at least two blocks along the axis
    whenever b allows it, so the 'parallel' grid axis can be sharded across
    the two TensorCores of a v7x megacore.
    """
    for t in (512, 256, 128):
        if b % t != 0:
            continue
        if prefer_split and t > 128 and b // t < 2:
            continue
        return t
    return None


def _lambda_loss_kernel(img_ref,      # VMEM (bm, D) bf16  logit_scale-folded image rows
                        txt_ref,      # VMEM (bn, D) bf16  text feature columns
                        z_img_ref,    # VMEM (bm, 1) f32   exp(bias)/B^2 * (lt-ll)/exp(ll), image
                        z_txt_ref,    # VMEM (1, bn) f32   exp(bias)/B^2 * (lt-ll)/exp(ll), text
                        out_img_ref,  # VMEM (1, 8, 128)   per-row-tile image divergence partial
                        out_txt_ref,  # VMEM (1, 8, 128)   per-row-tile text  divergence partial
                        *, log_pos_coef):
    j = pl.program_id(1)

    # (bm, bn) logits tile on the MXU: bf16 operands, f32 accumulation.
    # logit_scale is already folded into img_ref and exp(logit_bias) into the
    # z vectors, so there is no per-element affine work on this tile.
    dot = lax.dot_general(img_ref[...], txt_ref[...],
                          (((1,), (1,)), ((), ())),
                          preferred_element_type=jnp.float32)

    if log_pos_coef is not None:   # static: only traced when 0 < pos_coef != 1
        i = pl.program_id(0)
        bm, bn = img_ref.shape[0], txt_ref.shape[0]
        rows = lax.broadcasted_iota(jnp.int32, (bm, bn), 0) + i * bm
        cols = lax.broadcasted_iota(jnp.int32, (bm, bn), 1) + j * bn
        dot = dot + jnp.where(rows == cols, jnp.float32(log_pos_coef),
                              jnp.float32(0.0))
    # mask_diagonal=False -> no -inf masking.

    # exp(logsumexp(d)) == sum(exp(d)): a single exp pass per tile.
    # TODO(synk): a packed-bf16 / exp2 EUP path (v6e/v7x) would roughly double
    # transcendental throughput at small D but is skipped to stay within f32
    # tolerances on all generations (v5e has no bf16 EUP).
    e = jnp.exp(dot)
    row_part = jnp.sum(e, axis=1, keepdims=True)     # (bm, 1) partial row sums
    col_part = jnp.sum(e, axis=0, keepdims=True)     # (1, bn) partial col sums

    @pl.when(j == 0)
    def _init():
        out_img_ref[...] = jnp.zeros_like(out_img_ref)
        out_txt_ref[...] = jnp.zeros_like(out_txt_ref)

    # Image side: reduce to a scalar immediately (no (bm, 1) scratch needed).
    out_img_ref[...] += jnp.sum(row_part * z_img_ref[...])
    # Text side: this tile's contribution to sum_c cross_text[c] * z_text[c].
    out_txt_ref[...] += jnp.sum(col_part * z_txt_ref[...])

    # TODO(synk): '_sym', 'js', lambda_fit_neg_only and force_l2_loss branches
    # of LambdaLoss are config paths not exercised by 'div_kl' and are not
    # implemented.


@functools.partial(jax.jit,
                   static_argnames=("pos_coef", "div_reg_coef", "block_m", "block_n"))
def lambda_loss(image_features, text_features, logit_scale, logit_bias,
                log_target_image, log_target_text,
                log_lambda_image, log_lambda_text,
                *, pos_coef=1.0, div_reg_coef=0.1, block_m=None, block_n=None):
    B, D = image_features.shape
    if B % 128 != 0:
        # TODO(synk): pad-and-mask path for batch sizes not a multiple of 128.
        raise ValueError(f"batch size {B} must be a multiple of 128")

    bm = block_m if block_m is not None else _pick_tile(B, prefer_split=True)
    bn = block_n if block_n is not None else _pick_tile(B)
    ni, nj = B // bm, B // bn

    add_diag = (pos_coef > 0.0) and (pos_coef != 1.0)
    log_pos_coef = math.log(pos_coef) if add_diag else None

    scale = jnp.asarray(logit_scale, jnp.float32).reshape(())
    bias = jnp.asarray(logit_bias, jnp.float32).reshape(())

    ll_i = log_lambda_image.reshape(-1).astype(jnp.float32)
    lt_i = log_target_image.reshape(-1).astype(jnp.float32)
    ll_t = log_lambda_text.reshape(-1).astype(jnp.float32)
    lt_t = log_target_text.reshape(-1).astype(jnp.float32)

    # O(B) work stays in the wrapper: MSE regularizers and the z vectors.
    mse_img = jnp.mean((ll_i - lt_i) ** 2)
    mse_txt = jnp.mean((ll_t - lt_t) ** 2)

    # exp(dist) = exp(bias) * exp(scale * <img, txt>): fold exp(bias)/B^2 into
    # the per-sample z vectors so the kernel only exponentiates the raw dot.
    coef = jnp.exp(bias) / jnp.float32(B * B)
    z_img = (coef * (lt_i - ll_i) * jnp.exp(-ll_i)).reshape(B, 1)
    z_txt = (coef * (lt_t - ll_t) * jnp.exp(-ll_t)).reshape(1, B)

    # logit_scale folded into the image features before the bf16 cast (O(B*D)).
    img = (image_features.astype(jnp.float32) * scale).astype(jnp.bfloat16)
    txt = text_features.astype(jnp.bfloat16)
    # TODO(synk): no max-subtraction stabilization (matches the reference
    # module); an extreme learned logit_scale or unnormalized features could
    # overflow f32 in exp().

    # VMEM budget: double-buffered bf16 feature tiles + f32 tile temporaries,
    # capped below the physical per-core VMEM with headroom (64 MiB on v7x,
    # 128 MiB on v5e/v6e).
    need = (2 * 2 * (bm + bn) * D * 2       # double-buffered bf16 feature tiles
            + 4 * bm * bn * 4               # dot/exp f32 temporaries headroom
            + 2 * 2 * (bm + bn) * 4         # z vectors (double-buffered)
            + (2 << 20))
    try:
        phys = getattr(pltpu.get_tpu_info(), "vmem_capacity_bytes", 64 << 20)
    except Exception:
        phys = 64 << 20
    vmem_limit = int(min(phys - (16 << 20), max(16 << 20, need)))

    cost = pl.CostEstimate(
        flops=2 * B * B * D,
        transcendentals=B * B,
        bytes_accessed=int((1 + ni) * B * D * 2     # image once, text per row tile
                           + 4 * B * 4              # z vectors
                           + 2 * ni * 8 * 128 * 4), # partial outputs
    )

    kernel = functools.partial(_lambda_loss_kernel, log_pos_coef=log_pos_coef)

    out_img, out_txt = pl.pallas_call(
        kernel,
        out_shape=(jax.ShapeDtypeStruct((ni, 8, 128), jnp.float32),
                   jax.ShapeDtypeStruct((ni, 8, 128), jnp.float32)),
        grid_spec=pltpu.PrefetchScalarGridSpec(
            num_scalar_prefetch=0,
            grid=(ni, nj),
            in_specs=[
                pl.BlockSpec((bm, D), lambda i, j: (i, 0)),   # scaled image rows
                pl.BlockSpec((bn, D), lambda i, j: (j, 0)),   # text columns
                pl.BlockSpec((bm, 1), lambda i, j: (i, 0)),   # z_image (column)
                pl.BlockSpec((1, bn), lambda i, j: (0, j)),   # z_text (row)
            ],
            out_specs=(
                pl.BlockSpec((1, 8, 128), lambda i, j: (i, 0, 0)),
                pl.BlockSpec((1, 8, 128), lambda i, j: (i, 0, 0)),
            ),
        ),
        compiler_params=pltpu.CompilerParams(
            dimension_semantics=("parallel", "arbitrary"),
            vmem_limit_bytes=vmem_limit),
        cost_estimate=cost,
    )(img, txt, z_img, z_txt)

    image_div = jnp.sum(out_img[:, 0, 0])
    text_div = jnp.sum(out_txt[:, 0, 0])
    image_lambda_loss = div_reg_coef * mse_img + image_div
    text_lambda_loss = div_reg_coef * mse_txt + text_div
    return {"total_loss": image_lambda_loss + text_lambda_loss,
            "image_lambda_loss": image_lambda_loss,
            "text_lambda_loss": text_lambda_loss}


if __name__ == "__main__":
    key = jax.random.PRNGKey(0)
    B, D = 256, 128   # small demo; forces a 2x2 grid of 128x128 logits tiles
    k1, k2, k3, k4, k5, k6 = jax.random.split(key, 6)

    image_features = jax.random.normal(k1, (B, D), jnp.float32)
    text_features = jax.random.normal(k2, (B, D), jnp.float32)
    image_features = image_features / jnp.linalg.norm(image_features, axis=-1, keepdims=True)
    text_features = text_features / jnp.linalg.norm(text_features, axis=-1, keepdims=True)

    logit_scale = jnp.float32(10.0)
    logit_bias = jnp.float32(-5.0)

    log_target_image = 0.1 * jax.random.normal(k3, (B,), jnp.float32)
    log_target_text = 0.1 * jax.random.normal(k4, (B,), jnp.float32)
    log_lambda_image = 0.1 * jax.random.normal(k5, (B,), jnp.float32)
    log_lambda_text = 0.1 * jax.random.normal(k6, (B,), jnp.float32)

    out = lambda_loss(image_features, text_features, logit_scale, logit_bias,
                      log_target_image, log_target_text,
                      log_lambda_image, log_lambda_text,
                      pos_coef=1.0, div_reg_coef=0.1,
                      block_m=128, block_n=128)
    jax.block_until_ready(out)

    # Pure-JAX reference in the module's form, on the same scale-folded,
    # bf16-rounded features the kernel consumes.
    def reference():
        a = (image_features * logit_scale).astype(jnp.bfloat16).astype(jnp.float32)
        b = text_features.astype(jnp.bfloat16).astype(jnp.float32)
        dist = a @ b.T + logit_bias
        mse_img = jnp.mean((log_lambda_image - log_target_image) ** 2)
        mse_txt = jnp.mean((log_lambda_text - log_target_text) ** 2)
        cross_img = jnp.exp(jax.nn.logsumexp(dist, axis=-1))
        cross_txt = jnp.exp(jax.nn.logsumexp(dist, axis=0))
        z_i = (log_target_image - log_lambda_image) / jnp.exp(log_lambda_image)
        z_t = (log_target_text - log_lambda_text) / jnp.exp(log_lambda_text)
        li = 0.1 * mse_img + jnp.sum(cross_img * z_i) / B ** 2
        lt = 0.1 * mse_txt + jnp.sum(cross_txt * z_t) / B ** 2
        return li + lt, li, lt

    ref_total, ref_img, ref_txt = reference()

    assert jnp.allclose(out["image_lambda_loss"], ref_img, rtol=2e-3, atol=1e-6), (
        out["image_lambda_loss"], ref_img)
    assert jnp.allclose(out["text_lambda_loss"], ref_txt, rtol=2e-3, atol=1e-6), (
        out["text_lambda_loss"], ref_txt)
    assert jnp.allclose(out["total_loss"], ref_total, rtol=2e-3, atol=1e-6), (
        out["total_loss"], ref_total)

    print("KERNEL_OK")
</pallas_src>

<mosaic_0001>
module attributes {stable_mosaic.version = 11 : i64} {
  func.func @_lambda_loss_kernel(%arg0: i32, %arg1: i32, %arg2: memref<128x128xbf16, #tpu.memory_space<vmem>>, %arg3: memref<128x128xbf16, #tpu.memory_space<vmem>>, %arg4: memref<128x1xf32, #tpu.memory_space<vmem>>, %arg5: memref<1x128xf32, #tpu.memory_space<vmem>>, %arg6: memref<1x8x128xf32, #tpu.memory_space<vmem>>, %arg7: memref<1x8x128xf32, #tpu.memory_space<vmem>>) attributes {dimension_semantics = [#tpu.dimension_semantics<parallel>, #tpu.dimension_semantics<arbitrary>], iteration_bounds = array<i64: 2, 2>, scalar_prefetch = 0 : i64, scratch_operands = 0 : i64, tpu.core_type = #tpu.core_type<tc>, window_params = [{transform_indices = @transform_0, window_bounds = array<i64: 128, 128>}, {transform_indices = @transform_1, window_bounds = array<i64: 128, 128>}, {transform_indices = @transform_2, window_bounds = array<i64: 128, 1>}, {transform_indices = @transform_3, window_bounds = array<i64: 1, 128>}, {transform_indices = @transform_4, window_bounds = array<i64: 1, 8, 128>}, {transform_indices = @transform_5, window_bounds = array<i64: 1, 8, 128>}]} {
    %c0 = arith.constant 0 : index
    %c0_0 = arith.constant 0 : index
    %0 = vector.load %arg2[%c0, %c0_0] : memref<128x128xbf16, #tpu.memory_space<vmem>>, vector<128x128xbf16>
    %c0_1 = arith.constant 0 : index
    %c0_2 = arith.constant 0 : index
    %1 = vector.load %arg3[%c0_1, %c0_2] : memref<128x128xbf16, #tpu.memory_space<vmem>>, vector<128x128xbf16>
    %cst = arith.constant dense<0.000000e+00> : vector<128x128xf32>
    %2 = tpu.matmul %0, %1, %cst {dimension_numbers = #tpu.dot_dimension_numbers<[1], [1], [0], [0], [0, 0, 1, 0], [], []>} : vector<128x128xbf16>, vector<128x128xbf16>, vector<128x128xf32> -> vector<128x128xf32>
    %3 = math.exp %2 : vector<128x128xf32>
    %cst_3 = arith.constant dense<0.000000e+00> : vector<128xf32>
    %4 = vector.multi_reduction <add>, %3, %cst_3 [1] : vector<128x128xf32> to vector<128xf32>
    %5 = vector.shape_cast %4 : vector<128xf32> to vector<128x1xf32>
    %cst_4 = arith.constant dense<0.000000e+00> : vector<128xf32>
    %6 = vector.multi_reduction <add>, %3, %cst_4 [0] : vector<128x128xf32> to vector<128xf32>
    %7 = vector.shape_cast %6 : vector<128xf32> to vector<1x128xf32>
    %c0_i32 = arith.constant 0 : i32
    %8 = arith.cmpi eq, %arg1, %c0_i32 : i32
    %9 = arith.extui %8 : i1 to i32
    %c0_i32_5 = arith.constant 0 : i32
    %10 = arith.cmpi ne, %9, %c0_i32_5 : i32
    scf.if %10 {
      %cst_24 = arith.constant 0.000000e+00 : f32
      %31 = vector.broadcast %cst_24 : f32 to vector<1x8x128xf32>
      %c0_25 = arith.constant 0 : index
      %c0_26 = arith.constant 0 : index
      %c0_27 = arith.constant 0 : index
      %32 = vector.load %arg6[%c0_25, %c0_26, %c0_27] : memref<1x8x128xf32, #tpu.memory_space<vmem>>, vector<1x8x128xf32>
      tpu.vector_store %arg6[%c0_25, %c0_26, %c0_27], %31 {strides = array<i32>} : memref<1x8x128xf32, #tpu.memory_space<vmem>>, vector<1x8x128xf32>,
      %cst_28 = arith.constant 0.000000e+00 : f32
      %33 = vector.broadcast %cst_28 : f32 to vector<1x8x128xf32>
      %c0_29 = arith.constant 0 : index
      %c0_30 = arith.constant 0 : index
      %c0_31 = arith.constant 0 : index
      %34 = vector.load %arg7[%c0_29, %c0_30, %c0_31] : memref<1x8x128xf32, #tpu.memory_space<vmem>>, vector<1x8x128xf32>
      tpu.vector_store %arg7[%c0_29, %c0_30, %c0_31], %33 {strides = array<i32>} : memref<1x8x128xf32, #tpu.memory_space<vmem>>, vector<1x8x128xf32>,
    } else {
    }
    %c0_6 = arith.constant 0 : index
    %c0_7 = arith.constant 0 : index
    %c0_8 = arith.constant 0 : index
    %11 = vector.load %arg6[%c0_6, %c0_7, %c0_8] : memref<1x8x128xf32, #tpu.memory_space<vmem>>, vector<1x8x128xf32>
    %c0_9 = arith.constant 0 : index
    %c0_10 = arith.constant 0 : index
    %12 = vector.load %arg4[%c0_9, %c0_10] : memref<128x1xf32, #tpu.memory_space<vmem>>, vector<128x1xf32>
    %13 = arith.mulf %5, %12 : vector<128x1xf32>
    %14 = vector.shape_cast %13 : vector<128x1xf32> to vector<1x128x1xf32>
    %cst_11 = arith.constant dense<0.000000e+00> : vector<1xf32>
    %15 = vector.multi_reduction <add>, %14, %cst_11 [1, 2] : vector<1x128x1xf32> to vector<1xf32>
    %16 = vector.shape_cast %15 : vector<1xf32> to vector<1x1x1xf32>
    %17 = vector.extract %16[0, 0, 0] : f32 from vector<1x1x1xf32>
    %18 = vector.broadcast %17 : f32 to vector<1x8x128xf32>
    %19 = arith.addf %11, %18 : vector<1x8x128xf32>
    %c0_12 = arith.constant 0 : index
    %c0_13 = arith.constant 0 : index
    %c0_14 = arith.constant 0 : index
    %20 = vector.load %arg6[%c0_12, %c0_13, %c0_14] : memref<1x8x128xf32, #tpu.memory_space<vmem>>, vector<1x8x128xf32>
    tpu.vector_store %arg6[%c0_12, %c0_13, %c0_14], %19 {strides = array<i32>} : memref<1x8x128xf32, #tpu.memory_space<vmem>>, vector<1x8x128xf32>,
    %c0_15 = arith.constant 0 : index
    %c0_16 = arith.constant 0 : index
    %c0_17 = arith.constant 0 : index
    %21 = vector.load %arg7[%c0_15, %c0_16, %c0_17] : memref<1x8x128xf32, #tpu.memory_space<vmem>>, vector<1x8x128xf32>
    %c0_18 = arith.constant 0 : index
    %c0_19 = arith.constant 0 : index
    %22 = vector.load %arg5[%c0_18, %c0_19] : memref<1x128xf32, #tpu.memory_space<vmem>>, vector<1x128xf32>
    %23 = arith.mulf %7, %22 : vector<1x128xf32>
    %24 = vector.shape_cast %23 : vector<1x128xf32> to vector<1x1x128xf32>
    %cst_20 = arith.constant dense<0.000000e+00> : vector<1xf32>
    %25 = vector.multi_reduction <add>, %24, %cst_20 [1, 2] : vector<1x1x128xf32> to vector<1xf32>
    %26 = vector.shape_cast %25 : vector<1xf32> to vector<1x1x1xf32>
    %27 = vector.extract %26[0, 0, 0] : f32 from vector<1x1x1xf32>
    %28 = vector.broadcast %27 : f32 to vector<1x8x128xf32>
    %29 = arith.addf %21, %28 : vector<1x8x128xf32>
    %c0_21 = arith.constant 0 : index
    %c0_22 = arith.constant 0 : index
    %c0_23 = arith.constant 0 : index
    %30 = vector.load %arg7[%c0_21, %c0_22, %c0_23] : memref<1x8x128xf32, #tpu.memory_space<vmem>>, vector<1x8x128xf32>
    tpu.vector_store %arg7[%c0_21, %c0_22, %c0_23], %29 {strides = array<i32>} : memref<1x8x128xf32, #tpu.memory_space<vmem>>, vector<1x8x128xf32>,
    return
  }
  func.func @transform_0(%arg0: i32, %arg1: i32) -> (i32, i32) {
    %c0_i32 = arith.constant 0 : i32
    %c0_i32_0 = arith.constant 0 : i32
    return %arg0, %c0_i32 : i32, i32
  }
  func.func @transform_1(%arg0: i32, %arg1: i32) -> (i32, i32) {
    %c0_i32 = arith.constant 0 : i32
    %c0_i32_0 = arith.constant 0 : i32
    return %arg1, %c0_i32 : i32, i32
  }
  func.func @transform_2(%arg0: i32, %arg1: i32) -> (i32, i32) {
    %c0_i32 = arith.constant 0 : i32
    %c0_i32_0 = arith.constant 0 : i32
    return %arg0, %c0_i32 : i32, i32
  }
  func.func @transform_3(%arg0: i32, %arg1: i32) -> (i32, i32) {
    %c0_i32 = arith.constant 0 : i32
    %c0_i32_0 = arith.constant 0 : i32
    return %c0_i32, %arg1 : i32, i32
  }
  func.func @transform_4(%arg0: i32, %arg1: i32) -> (i32, i32, i32) {
    %c0_i32 = arith.constant 0 : i32
    %c0_i32_0 = arith.constant 0 : i32
    %c0_i32_1 = arith.constant 0 : i32
    return %arg0, %c0_i32, %c0_i32_0 : i32, i32, i32
  }
  func.func @transform_5(%arg0: i32, %arg1: i32) -> (i32, i32, i32) {
    %c0_i32 = arith.constant 0 : i32
    %c0_i32_0 = arith.constant 0 : i32
    %c0_i32_1 = arith.constant 0 : i32
    return %arg0, %c0_i32, %c0_i32_0 : i32, i32, i32
  }
}

</mosaic_0001>

<llo_original>
// kernel: lambda_loss.1
$region0: #{lambda_loss.1}
  #allocation0 [shape = 'u32[]', space=smem, size = 0x4, offset = 0x4, fixed_abs, tag = 'smem constant byte address 0x4 - core index']
  #allocation1 [shape = 'u32[144,128]{1,0:T(1,128)}', space=vmem, size = 0x12000, scoped, tag = 'internal scratch']
  %s0 = inlined_call_operand.vmem [shape: bf16[256,128], index: 0, kind: input, shape index: {}]
  %s1 = inlined_call_operand.vmem [shape: bf16[256,128], index: 1, kind: input, shape index: {}]
  %s2 = inlined_call_operand.vmem [shape: f32[256,1], index: 2, kind: input, shape index: {}]
  %s3 = inlined_call_operand.vmem [shape: f32[1,256], index: 3, kind: input, shape index: {}]
  %s4 = inlined_call_operand.vmem [shape: f32[2,8,128], index: 4, kind: output, shape index: {0}]
  %s5 = inlined_call_operand.vmem [shape: f32[2,8,128], index: 5, kind: output, shape index: {1}]
  %6 = xla_tuple %s4, %s5
  %s7 = sld [smem:[#allocation0]]
  $region61: #{lambda_loss.1} parent=0
    _
  %s9 = ssub.s32 1, %s7
  %s10 = scalar_select 0, %s9, %s7
  loop: start=0, step=1, limit=6
  $region2: #{lambda_loss.1} parent=0 // loop_pre_header
    _
  $region3: #{lambda_loss.1} parent=0 // loop_header
    %s12 = sphi 0, %s16
    %p13 = scmp.ge.s32.totalorder %s12, 6
    %s19 = sphi 0, %s31
    %s20 = sphi 0, %s27
    %s21 = sphi 0, %s19
    %s22 = sphi 0, %s20
    %s23 = sphi 0, %s21
    %s24 = sphi 0, %s22
    %s34 = sphi 0, %s36
    %s37 = sphi 0, %s34
    %s38 = sphi 0, %s37
    %s54 = sphi 0, %s38
    %s60 = sphi 0, %s62
    %s63 = sphi 0, %s60
    %s64 = sphi 0, %s63
    %s80 = sphi 0, %s64
    %s86 = sphi 0, %s88
    %s89 = sphi 0, %s86
    %s90 = sphi 0, %s89
    %s106 = sphi 0, %s90
    %s112 = sphi 0, %s114
    %s115 = sphi 0, %s112
    %s116 = sphi 0, %s115
    %s132 = sphi 0, %s116
    %s138 = sphi 0, %s140
    %s141 = sphi 0, %s138
    %s142 = sphi 0, %s141
    %s158 = sphi 0, %s142
    %s164 = sphi 0, %s166
    %s167 = sphi 0, %s164
    %s168 = sphi 0, %s167
    %s184 = sphi 0, %s168
  $region4: #{lambda_loss.1} parent=0 // loop_header_branch
    %15 = sbr.rel (%p13) target = $region8
  $region5: #{lambda_loss.1} parent=0 // loop_body
    %s17 = ssub.s32 %s12, 1
    %s18 = ssub.s32 %s12, 2
    %s25 = sadd.s32 1, %s20
    %p26 = scmp.ge.s32.totalorder %s25, 2
    %s27 = scalar_select %p26, 0, %s25
    %s28 = sadd.s32 1, %s19
    %s29 = scalar_select %p26, %s28, %s19
    %p30 = scmp.ge.s32.totalorder %s29, 2
    %s31 = scalar_select %p30, 0, %s29
    %s32 = ssub.s32 %s19, %s31
    %p33 = scmp.eq.s32.totalorder %s32, 0
    %s35 = sadd.s32 %s34, 1
    %s36 = scalar_select %p33, %s34, %s35
    %p39 = pneg %p33
    %p40 = scmp.eq.s32.totalorder %s12, 3
    %p41 = por %p39, %p40
    %p42 = scmp.ne.s32.totalorder %s34, %s37
    %p43 = scmp.eq.s32.totalorder %s12, 0
    %p44 = por %p42, %p43
    %p45 = scmp.ne.s32.totalorder %s34, %s37
    %p46 = scmp.eq.s32.totalorder %s17, 3
    %p47 = por %p45, %p46
    %p48 = scmp.ne.s32.totalorder %s37, %s38
    %p49 = scmp.eq.s32.totalorder %s17, 0
    %p50 = por %p48, %p49
    %p51 = scmp.ne.s32.totalorder %s37, %s38
    %p52 = scmp.eq.s32.totalorder %s18, 3
    %p53 = por %p51, %p52
    %p55 = scmp.ne.s32.totalorder %s38, %s54
    %p56 = scmp.eq.s32.totalorder %s18, 0
    %p57 = por %p55, %p56
    %s58 = ssub.s32 %s20, %s27
    %p59 = scmp.eq.s32.totalorder %s58, 0
    %s61 = sadd.s32 %s60, 1
    %s62 = scalar_select %p59, %s60, %s61
    %p65 = pneg %p59
    %p66 = scmp.eq.s32.totalorder %s12, 3
    %p67 = por %p65, %p66
    %p68 = scmp.ne.s32.totalorder %s60, %s63
    %p69 = scmp.eq.s32.totalorder %s12, 0
    %p70 = por %p68, %p69
    %p71 = scmp.ne.s32.totalorder %s60, %s63
    %p72 = scmp.eq.s32.totalorder %s17, 3
    %p73 = por %p71, %p72
    %p74 = scmp.ne.s32.totalorder %s63, %s64
    %p75 = scmp.eq.s32.totalorder %s17, 0
    %p76 = por %p74, %p75
    %p77 = scmp.ne.s32.totalorder %s63, %s64
    %p78 = scmp.eq.s32.totalorder %s18, 3
    %p79 = por %p77, %p78
    %p81 = scmp.ne.s32.totalorder %s64, %s80
    %p82 = scmp.eq.s32.totalorder %s18, 0
    %p83 = por %p81, %p82
    %s84 = ssub.s32 %s19, %s31
    %p85 = scmp.eq.s32.totalorder %s84, 0
    %s87 = sadd.s32 %s86, 1
    %s88 = scalar_select %p85, %s86, %s87
    %p91 = pneg %p85
    %p92 = scmp.eq.s32.totalorder %s12, 3
    %p93 = por %p91, %p92
    %p94 = scmp.ne.s32.totalorder %s86, %s89
    %p95 = scmp.eq.s32.totalorder %s12, 0
    %p96 = por %p94, %p95
    %p97 = scmp.ne.s32.totalorder %s86, %s89
    %p98 = scmp.eq.s32.totalorder %s17, 3
    %p99 = por %p97, %p98
    %p100 = scmp.ne.s32.totalorder %s89, %s90
    %p101 = scmp.eq.s32.totalorder %s17, 0
    %p102 = por %p100, %p101
    %p103 = scmp.ne.s32.totalorder %s89, %s90
    %p104 = scmp.eq.s32.totalorder %s18, 3
    %p105 = por %p103, %p104
    %p107 = scmp.ne.s32.totalorder %s90, %s106
    %p108 = scmp.eq.s32.totalorder %s18, 0
    %p109 = por %p107, %p108
    %s110 = ssub.s32 %s20, %s27
    %p111 = scmp.eq.s32.totalorder %s110, 0
    %s113 = sadd.s32 %s112, 1
    %s114 = scalar_select %p111, %s112, %s113
    %p117 = pneg %p111
    %p118 = scmp.eq.s32.totalorder %s12, 3
    %p119 = por %p117, %p118
    %p120 = scmp.ne.s32.totalorder %s112, %s115
    %p121 = scmp.eq.s32.totalorder %s12, 0
    %p122 = por %p120, %p121
    %p123 = scmp.ne.s32.totalorder %s112, %s115
    %p124 = scmp.eq.s32.totalorder %s17, 3
    %p125 = por %p123, %p124
    %p126 = scmp.ne.s32.totalorder %s115, %s116
    %p127 = scmp.eq.s32.totalorder %s17, 0
    %p128 = por %p126, %p127
    %p129 = scmp.ne.s32.totalorder %s115, %s116
    %p130 = scmp.eq.s32.totalorder %s18, 3
    %p131 = por %p129, %p130
    %p133 = scmp.ne.s32.totalorder %s116, %s132
    %p134 = scmp.eq.s32.totalorder %s18, 0
    %p135 = por %p133, %p134
    %s136 = ssub.s32 %s19, %s31
    %p137 = scmp.eq.s32.totalorder %s136, 0
    %s139 = sadd.s32 %s138, 1
    %s140 = scalar_select %p137, %s138, %s139
    %p143 = pneg %p137
    %p144 = scmp.eq.s32.totalorder %s12, 3
    %p145 = por %p143, %p144
    %p146 = scmp.ne.s32.totalorder %s138, %s141
    %p147 = scmp.eq.s32.totalorder %s12, 0
    %p148 = por %p146, %p147
    %p149 = scmp.ne.s32.totalorder %s138, %s141
    %p150 = scmp.eq.s32.totalorder %s17, 3
    %p151 = por %p149, %p150
    %p152 = scmp.ne.s32.totalorder %s141, %s142
    %p153 = scmp.eq.s32.totalorder %s17, 0
    %p154 = por %p152, %p153
    %p155 = scmp.ne.s32.totalorder %s141, %s142
    %p156 = scmp.eq.s32.totalorder %s18, 3
    %p157 = por %p155, %p156
    %p159 = scmp.ne.s32.totalorder %s142, %s158
    %p160 = scmp.eq.s32.totalorder %s18, 0
    %p161 = por %p159, %p160
    %s162 = ssub.s32 %s19, %s31
    %p163 = scmp.eq.s32.totalorder %s162, 0
    %s165 = sadd.s32 %s164, 1
    %s166 = scalar_select %p163, %s164, %s165
    %p169 = pneg %p163
    %p170 = scmp.eq.s32.totalorder %s12, 3
    %p171 = por %p169, %p170
    %p172 = scmp.ne.s32.totalorder %s164, %s167
    %p173 = scmp.eq.s32.totalorder %s12, 0
    %p174 = por %p172, %p173
    %p175 = scmp.ne.s32.totalorder %s164, %s167
    %p176 = scmp.eq.s32.totalorder %s17, 3
    %p177 = por %p175, %p176
    %p178 = scmp.ne.s32.totalorder %s167, %s168
    %p179 = scmp.eq.s32.totalorder %s17, 0
    %p180 = por %p178, %p179
    %p181 = scmp.ne.s32.totalorder %s167, %s168
    %p182 = scmp.eq.s32.totalorder %s18, 3
    %p183 = por %p181, %p182
    %p185 = scmp.ne.s32.totalorder %s168, %s184
    %p186 = scmp.eq.s32.totalorder %s18, 0
    %p187 = por %p185, %p186
    %p188 = scmp.le.s32.totalorder 1, %s12
    %p189 = scmp.lt.s32.totalorder %s12, 5
    %p190 = pnand %p188, %p189
    %p191 = pneg %p190
    // Predicated region
    $region9: #{lambda_loss.1} parent=5 // pred_check
      _
    $region10: #{lambda_loss.1} parent=5 // pred_check_branch
      %193 = sbr.rel (%p190) target = $region12
    $region11: #{lambda_loss.1} parent=5 // pred_region
      %s194 = ssub.s32 %s12, 1
    $region12: #{lambda_loss.1} parent=5 // pred_fallthru
      _
    %p195 = scmp.lt.s32.totalorder %s12, 4
    // Predicated region
    $region13: #{lambda_loss.1} parent=5 // pred_check
      %p196 = pneg %p195
    $region14: #{lambda_loss.1} parent=5 // pred_check_branch
      %198 = sbr.rel (%p196) target = $region16
    $region15: #{lambda_loss.1} parent=5 // pred_region
      // Predicated region
      $region17: #{lambda_loss.1} parent=15 // pred_check
        %p199 = pneg %p44
      $region18: #{lambda_loss.1} parent=15 // pred_check_branch
        %201 = sbr.rel (%p199) target = $region20
      $region19: #{lambda_loss.1} parent=15 // pred_region
        %s202 = smul.u32 16, %s19
        %p203 = scmp.lt.s32.totalorder %s202, 31
        %s204 = scalar_select %p203, %s202, 31
        %s205 = smul.addr %s204, 4
        %s206 = scalar_lea.vmem %s0, %s205
        %s207 = smul.u32 16, %s19
      $region20: #{lambda_loss.1} parent=15 // pred_fallthru
        _
      // Predicated region
      $region21: #{lambda_loss.1} parent=15 // pred_check
        %p208 = pneg %p70
      $region22: #{lambda_loss.1} parent=15 // pred_check_branch
        %210 = sbr.rel (%p208) target = $region24
      $region23: #{lambda_loss.1} parent=15 // pred_region
        %s211 = smul.u32 16, %s20
        %p212 = scmp.lt.s32.totalorder %s211, 31
        %s213 = scalar_select %p212, %s211, 31
        %s214 = smul.addr %s213, 4
        %s215 = scalar_lea.vmem %s1, %s214
        %s216 = smul.u32 16, %s20
      $region24: #{lambda_loss.1} parent=15 // pred_fallthru
        _
      // Predicated region
      $region25: #{lambda_loss.1} parent=15 // pred_check
        %p217 = pneg %p96
      $region26: #{lambda_loss.1} parent=15 // pred_check_branch
        %219 = sbr.rel (%p217) target = $region28
      $region27: #{lambda_loss.1} parent=15 // pred_region
        %s220 = smul.u32 16, %s19
        %p221 = scmp.lt.s32.totalorder %s220, 31
        %s222 = scalar_select %p221, %s220, 31
        %s223 = smul.addr %s222, 8
        %s224 = scalar_lea.vmem %s2, %s223
        %s225 = smul.u32 16, %s19
      $region28: #{lambda_loss.1} parent=15 // pred_fallthru
        _
      // Predicated region
      $region29: #{lambda_loss.1} parent=15 // pred_check
        %p226 = pneg %p122
      $region30: #{lambda_loss.1} parent=15 // pred_check_branch
        %228 = sbr.rel (%p226) target = $region32
      $region31: #{lambda_loss.1} parent=15 // pred_region
        %p229 = scmp.lt.s32.totalorder %s20, 1
        %s230 = scalar_select %p229, %s20, 1
        %s231 = scalar_lea.vmem %s3, %s230
      $region32: #{lambda_loss.1} parent=15 // pred_fallthru
        _
    $region16: #{lambda_loss.1} parent=5 // pred_fallthru
      _
    %p232 = scmp.le.s32.totalorder 1, %s12
    %p233 = scmp.lt.s32.totalorder %s12, 5
    %p234 = pnand %p232, %p233
    %p235 = pneg %p234
    // Predicated region
    $region33: #{lambda_loss.1} parent=5 // pred_check
      _
    $region34: #{lambda_loss.1} parent=5 // pred_check_branch
      %237 = sbr.rel (%p234) target = $region36
    $region35: #{lambda_loss.1} parent=5 // pred_region
      %s238 = ssub.s32 %s12, 1
      %s239 = smul.u32 16, %s21
      %p240 = scmp.lt.s32.totalorder %s239, 31
      %s241 = scalar_select %p240, %s239, 31
      %s242 = smul.addr %s241, 4
      %s243 = scalar_lea.vmem %s0, %s242
      %p244 = pneg %p50
      %p245 = pneg %p47
      %s246 = smul.u32 16, %s22
      %p247 = scmp.lt.s32.totalorder %s246, 31
      %s248 = scalar_select %p247, %s246, 31
      %s249 = smul.addr %s248, 4
      %s250 = scalar_lea.vmem %s1, %s249
      %p251 = pneg %p76
      %p252 = pneg %p73
      %s253 = smul.u32 16, %s21
      %p254 = scmp.lt.s32.totalorder %s253, 31
      %s255 = scalar_select %p254, %s253, 31
      %s256 = smul.addr %s255, 8
      %s257 = scalar_lea.vmem %s2, %s256
      %p258 = pneg %p102
      %p259 = pneg %p99
      %p260 = scmp.lt.s32.totalorder %s22, 1
      %s261 = scalar_select %p260, %s22, 1
      %s262 = scalar_lea.vmem %s3, %s261
      %p263 = pneg %p128
      %p264 = pneg %p125
      %p265 = pneg %p154
      %p266 = pneg %p151
      %p267 = scmp.lt.s32.totalorder %s21, 1
      %s268 = scalar_select %p267, %s21, 1
      %s269 = smul.addr %s268, 8
      %s270 = scalar_lea.vmem %s4, %s269
      %p271 = pneg %p180
      %p272 = pneg %p177
      %p273 = scmp.lt.s32.totalorder %s21, 1
      %s274 = scalar_select %p273, %s21, 1
      %s275 = smul.addr %s274, 8
      %s276 = scalar_lea.vmem %s5, %s275
      %s277 = smul.u32 16, %s21
      %p278 = scmp.lt.s32.totalorder %s277, 31
      %s279 = scalar_select %p278, %s277, 31
      %s280 = smul.addr %s279, 4
      %s281 = scalar_lea.vmem %s0, %s280
      %s282 = smul.u32 16, %s21
      %s283 = smul.u32 16, %s22
      %p284 = scmp.lt.s32.totalorder %s283, 31
      %s285 = scalar_select %p284, %s283, 31
      %s286 = smul.addr %s285, 4
      %s287 = scalar_lea.vmem %s1, %s286
      %s288 = smul.u32 16, %s22
      %s289 = smul.u32 16, %s21
      %p290 = scmp.lt.s32.totalorder %s289, 31
      %s291 = scalar_select %p290, %s289, 31
      %s292 = smul.addr %s291, 8
      %s293 = scalar_lea.vmem %s2, %s292
      %s294 = smul.u32 16, %s21
      %p295 = scmp.lt.s32.totalorder %s22, 1
      %s296 = scalar_select %p295, %s22, 1
      %s297 = scalar_lea.vmem %s3, %s296
      %p298 = scmp.lt.s32.totalorder %s21, 1
      %s299 = scalar_select %p298, %s21, 1
      %s300 = smul.addr %s299, 8
      %s301 = scalar_lea.vmem %s4, %s300
      %p302 = scmp.lt.s32.totalorder %s21, 1
      %s303 = scalar_select %p302, %s21, 1
      %s304 = smul.addr %s303, 8
      %s305 = scalar_lea.vmem %s5, %s304
      %v307 = vld [vmem:[%s281] sm:$0xf]
      %v308 = vld [vmem:[%s281 + $0x4] sm:$0xf]
      %v309 = vld [vmem:[%s281 + $0x8] sm:$0xf]
      %v310 = vld [vmem:[%s281 + $0xc] sm:$0xf]
      %v311 = vld [vmem:[%s281 + $0x10] sm:$0xf]
      %v312 = vld [vmem:[%s281 + $0x14] sm:$0xf]
      %v313 = vld [vmem:[%s281 + $0x18] sm:$0xf]
      %v314 = vld [vmem:[%s281 + $0x1c] sm:$0xf]
      %v315 = vld [vmem:[%s281 + $0x20] sm:$0xf]
      %v316 = vld [vmem:[%s281 + $0x24] sm:$0xf]
      %v317 = vld [vmem:[%s281 + $0x28] sm:$0xf]
      %v318 = vld [vmem:[%s281 + $0x2c] sm:$0xf]
      %v319 = vld [vmem:[%s281 + $0x30] sm:$0xf]
      %v320 = vld [vmem:[%s281 + $0x34] sm:$0xf]
      %v321 = vld [vmem:[%s281 + $0x38] sm:$0xf]
      %v322 = vld [vmem:[%s281 + $0x3c] sm:$0xf]
      %v323 = vld [vmem:[%s287] sm:$0xf]
      %v324 = vld [vmem:[%s287 + $0x4] sm:$0xf]
      %v325 = vld [vmem:[%s287 + $0x8] sm:$0xf]
      %v326 = vld [vmem:[%s287 + $0xc] sm:$0xf]
      %v327 = vld [vmem:[%s287 + $0x10] sm:$0xf]
      %v328 = vld [vmem:[%s287 + $0x14] sm:$0xf]
      %v329 = vld [vmem:[%s287 + $0x18] sm:$0xf]
      %v330 = vld [vmem:[%s287 + $0x1c] sm:$0xf]
      %v331 = vld [vmem:[%s287 + $0x20] sm:$0xf]
      %v332 = vld [vmem:[%s287 + $0x24] sm:$0xf]
      %v333 = vld [vmem:[%s287 + $0x28] sm:$0xf]
      %v334 = vld [vmem:[%s287 + $0x2c] sm:$0xf]
      %v335 = vld [vmem:[%s287 + $0x30] sm:$0xf]
      %v336 = vld [vmem:[%s287 + $0x34] sm:$0xf]
      %v337 = vld [vmem:[%s287 + $0x38] sm:$0xf]
      %v338 = vld [vmem:[%s287 + $0x3c] sm:$0xf]
      %v355 = vunpack.c.l.b16 %v307
      %v356 = vunpack.c.l.b16 %v308
      %v357 = vunpack.c.l.b16 %v309
      %v358 = vunpack.c.l.b16 %v310
      %v359 = vunpack.c.l.b16 %v311
      %v360 = vunpack.c.l.b16 %v312
      %v361 = vunpack.c.l.b16 %v313
      %v362 = vunpack.c.l.b16 %v314
      %v363 = vunpack.c.l.b16 %v315
      %v364 = vunpack.c.l.b16 %v316
      %v365 = vunpack.c.l.b16 %v317
      %v366 = vunpack.c.l.b16 %v318
      %v367 = vunpack.c.l.b16 %v319
      %v368 = vunpack.c.l.b16 %v320
      %v369 = vunpack.c.l.b16 %v321
      %v370 = vunpack.c.l.b16 %v322
      %v371 = vpack.c.b16 %v356, %v355
      %v372 = vpack.c.b16 %v358, %v357
      %v373 = vpack.c.b16 %v360, %v359
      %v374 = vpack.c.b16 %v362, %v361
      %v375 = vpack.c.b16 %v364, %v363
      %v376 = vpack.c.b16 %v366, %v365
      %v377 = vpack.c.b16 %v368, %v367
      %v378 = vpack.c.b16 %v370, %v369
      %v403 = vunpack.c.l.b16 %v323
      %v404 = vunpack.c.l.b16 %v324
      %v405 = vunpack.c.l.b16 %v325
      %v406 = vunpack.c.l.b16 %v326
      %v407 = vunpack.c.l.b16 %v327
      %v408 = vunpack.c.l.b16 %v328
      %v409 = vunpack.c.l.b16 %v329
      %v410 = vunpack.c.l.b16 %v330
      %v411 = vunpack.c.l.b16 %v331
      %v412 = vunpack.c.l.b16 %v332
      %v413 = vunpack.c.l.b16 %v333
      %v414 = vunpack.c.l.b16 %v334
      %v415 = vunpack.c.l.b16 %v335
      %v416 = vunpack.c.l.b16 %v336
      %v417 = vunpack.c.l.b16 %v337
      %v418 = vunpack.c.l.b16 %v338
      %v419 = vpack.c.b16 %v404, %v403
      %v420 = vpack.c.b16 %v406, %v405
      %v421 = vpack.c.b16 %v408, %v407
      %v422 = vpack.c.b16 %v410, %v409
      %v423 = vpack.c.b16 %v412, %v411
      %v424 = vpack.c.b16 %v414, %v413
      %v425 = vpack.c.b16 %v416, %v415
      %v426 = vpack.c.b16 %v418, %v417
      %435 = vmatprep.subr.bf16.mxu0 0
      %436 = vmatpush1.bf16.xpose.msra.mxu0 %v419
      %437 = vmatprep.subr.bf16.mxu0 0
      %438 = vmatpush1.bf16.xpose.msra.mxu0 %v420
      %439 = vmatprep.subr.bf16.mxu0 0
      %440 = vmatpush1.bf16.xpose.msra.mxu0 %v421
      %441 = vmatprep.subr.bf16.mxu0 0
      %442 = vmatpush1.bf16.xpose.msra.mxu0 %v422
      %443 = vmatprep.subr.bf16.mxu0 0
      %444 = vmatpush1.bf16.xpose.msra.mxu0 %v423
      %445 = vmatprep.subr.bf16.mxu0 0
      %446 = vmatpush1.bf16.xpose.msra.mxu0 %v424
      %447 = vmatprep.subr.bf16.mxu0 0
      %448 = vmatpush1.bf16.xpose.msra.mxu0 %v425
      %449 = vmatprep.subr.bf16.mxu0 0
      %450 = vmatpush1.bf16.xpose.msra.mxu0 %v426
      %451 = vmatprep.subr.bf16.mxu0 0
      %452 = vmatpush1.bf16.xpose.msra.mxu0 0
      %453 = vmatprep.subr.bf16.mxu0 0
      %454 = vmatpush1.bf16.xpose.msra.mxu0 0
      %455 = vmatprep.subr.bf16.mxu0 0
      %456 = vmatpush1.bf16.xpose.msra.mxu0 0
      %457 = vmatprep.subr.bf16.mxu0 0
      %458 = vmatpush1.bf16.xpose.msra.mxu0 0
      %459 = vmatprep.subr.bf16.mxu0 0
      %460 = vmatpush1.bf16.xpose.msra.mxu0 0
      %461 = vmatprep.subr.bf16.mxu0 0
      %462 = vmatpush1.bf16.xpose.msra.mxu0 0
      %463 = vmatprep.subr.bf16.mxu0 0
      %464 = vmatpush1.bf16.xpose.msra.mxu0 0
      %465 = vmatprep.subr.bf16.mxu0 0
      %466 = vmatpush1.bf16.xpose.msra.mxu0 0
      %467 = vmatprep.mubr.bf16.mxu0 0
      %468 = vmatmul.mubr.bf16.gmra.mrb[0].mxu0 %v371
      %v469 = vpop.f32.mrb[0].mxu0
      %v470 = vadd.f32 0.0, %v469
      %v471 = vpop.f32.mrb[0].mxu0
      %v472 = vpop.f32.mrb[0].mxu0
      %v473 = vadd.f32 0.0, %v472
      %v474 = vpop.f32.mrb[0].mxu0
      %475 = vmatprep.mubr.bf16.mxu0 0
      %476 = vmatmul.mubr.bf16.gmra.mrb[0].mxu0 %v372
      %v477 = vpop.f32.mrb[0].mxu0
      %v478 = vadd.f32 0.0, %v477
      %v479 = vpop.f32.mrb[0].mxu0
      %v480 = vpop.f32.mrb[0].mxu0
      %v481 = vadd.f32 0.0, %v480
      %v482 = vpop.f32.mrb[0].mxu0
      %483 = vmatprep.mubr.bf16.mxu0 0
      %484 = vmatmul.mubr.bf16.gmra.mrb[0].mxu0 %v373
      %v485 = vpop.f32.mrb[0].mxu0
      %v486 = vadd.f32 0.0, %v485
      %v487 = vpop.f32.mrb[0].mxu0
      %v488 = vpop.f32.mrb[0].mxu0
      %v489 = vadd.f32 0.0, %v488
      %v490 = vpop.f32.mrb[0].mxu0
      %491 = vmatprep.mubr.bf16.mxu0 0
      %492 = vmatmul.mubr.bf16.gmra.mrb[0].mxu0 %v374
      %v493 = vpop.f32.mrb[0].mxu0
      %v494 = vadd.f32 0.0, %v493
      %v495 = vpop.f32.mrb[0].mxu0
      %v496 = vpop.f32.mrb[0].mxu0
      %v497 = vadd.f32 0.0, %v496
      %v498 = vpop.f32.mrb[0].mxu0
      %499 = vmatprep.mubr.bf16.mxu0 0
      %500 = vmatmul.mubr.bf16.gmra.mrb[0].mxu0 %v375
      %v501 = vpop.f32.mrb[0].mxu0
      %v502 = vadd.f32 0.0, %v501
      %v503 = vpop.f32.mrb[0].mxu0
      %v504 = vpop.f32.mrb[0].mxu0
      %v505 = vadd.f32 0.0, %v504
      %v506 = vpop.f32.mrb[0].mxu0
      %507 = vmatprep.mubr.bf16.mxu0 0
      %508 = vmatmul.mubr.bf16.gmra.mrb[0].mxu0 %v376
      %v509 = vpop.f32.mrb[0].mxu0
      %v510 = vadd.f32 0.0, %v509
      %v511 = vpop.f32.mrb[0].mxu0
      %v512 = vpop.f32.mrb[0].mxu0
      %v513 = vadd.f32 0.0, %v512
      %v514 = vpop.f32.mrb[0].mxu0
      %515 = vmatprep.mubr.bf16.mxu0 0
      %516 = vmatmul.mubr.bf16.gmra.mrb[0].mxu0 %v377
      %v517 = vpop.f32.mrb[0].mxu0
      %v518 = vadd.f32 0.0, %v517
      %v519 = vpop.f32.mrb[0].mxu0
      %v520 = vpop.f32.mrb[0].mxu0
      %v521 = vadd.f32 0.0, %v520
      %v522 = vpop.f32.mrb[0].mxu0
      %523 = vmatprep.mubr.bf16.mxu0 0
      %524 = vmatmul.mubr.bf16.gmra.mrb[0].mxu0 %v378
      %v525 = vpop.f32.mrb[0].mxu0
      %v526 = vadd.f32 0.0, %v525
      %v527 = vpop.f32.mrb[0].mxu0
      %v528 = vpop.f32.mrb[0].mxu0
      %v529 = vadd.f32 0.0, %v528
      %v530 = vpop.f32.mrb[0].mxu0
      %531 = vdwg.mxu0
      %v532 = vmul.f32 %v470, 1.442695
      %v533 = vpow.pop %v532
      %v534 = vmul.f32 %v473, 1.442695
      %v535 = vpow.pop %v534
      %v536 = vmul.f32 %v478, 1.442695
      %v537 = vpow.pop %v536
      %v538 = vmul.f32 %v481, 1.442695
      %v539 = vpow.pop %v538
      %v540 = vmul.f32 %v486, 1.442695
      %v541 = vpow.pop %v540
      %v542 = vmul.f32 %v489, 1.442695
      %v543 = vpow.pop %v542
      %v544 = vmul.f32 %v494, 1.442695
      %v545 = vpow.pop %v544
      %v546 = vmul.f32 %v497, 1.442695
      %v547 = vpow.pop %v546
      %v548 = vmul.f32 %v502, 1.442695
      %v549 = vpow.pop %v548
      %v550 = vmul.f32 %v505, 1.442695
      %v551 = vpow.pop %v550
      %v552 = vmul.f32 %v510, 1.442695
      %v553 = vpow.pop %v552
      %v554 = vmul.f32 %v513, 1.442695
      %v555 = vpow.pop %v554
      %v556 = vmul.f32 %v518, 1.442695
      %v557 = vpow.pop %v556
      %v558 = vmul.f32 %v521, 1.442695
      %v559 = vpow.pop %v558
      %v560 = vmul.f32 %v526, 1.442695
      %v561 = vpow.pop %v560
      %v562 = vmul.f32 %v529, 1.442695
      %v563 = vpow.pop %v562
      %564 = vadd.xlane.f32.xlu0 %v533
      %v565 = vpop.xlane.xlu0 %564
      %566 = vadd.xlane.f32.xlu0 %v535
      %v567 = vpop.xlane.xlu0 %566
      %568 = vadd.xlane.f32.xlu0 %v537
      %v569 = vpop.xlane.xlu0 %568
      %570 = vadd.xlane.f32.xlu0 %v539
      %v571 = vpop.xlane.xlu0 %570
      %572 = vadd.xlane.f32.xlu0 %v541
      %v573 = vpop.xlane.xlu0 %572
      %574 = vadd.xlane.f32.xlu0 %v543
      %v575 = vpop.xlane.xlu0 %574
      %576 = vadd.xlane.f32.xlu0 %v545
      %v577 = vpop.xlane.xlu0 %576
      %578 = vadd.xlane.f32.xlu0 %v547
      %v579 = vpop.xlane.xlu0 %578
      %580 = vadd.xlane.f32.xlu0 %v549
      %v581 = vpop.xlane.xlu0 %580
      %582 = vadd.xlane.f32.xlu0 %v551
      %v583 = vpop.xlane.xlu0 %582
      %584 = vadd.xlane.f32.xlu0 %v553
      %v585 = vpop.xlane.xlu0 %584
      %586 = vadd.xlane.f32.xlu0 %v555
      %v587 = vpop.xlane.xlu0 %586
      %588 = vadd.xlane.f32.xlu0 %v557
      %v589 = vpop.xlane.xlu0 %588
      %590 = vadd.xlane.f32.xlu0 %v559
      %v591 = vpop.xlane.xlu0 %590
      %592 = vadd.xlane.f32.xlu0 %v561
      %v593 = vpop.xlane.xlu0 %592
      %594 = vadd.xlane.f32.xlu0 %v563
      %v595 = vpop.xlane.xlu0 %594
      %v596 = vadd.f32 %v533, %v535
      %v597 = vadd.f32 %v596, %v537
      %v598 = vadd.f32 %v597, %v539
      %v599 = vadd.f32 %v598, %v541
      %v600 = vadd.f32 %v599, %v543
      %v601 = vadd.f32 %v600, %v545
      %v602 = vadd.f32 %v601, %v547
      %v603 = vadd.f32 %v602, %v549
      %v604 = vadd.f32 %v603, %v551
      %v605 = vadd.f32 %v604, %v553
      %v606 = vadd.f32 %v605, %v555
      %v607 = vadd.f32 %v606, %v557
      %v608 = vadd.f32 %v607, %v559
      %v609 = vadd.f32 %v608, %v561
      %v610 = vadd.f32 %v609, %v563
      %v611 = vrot.slane %v610, 4
      %v612 = vadd.f32 %v610, %v611
      %v613 = vrot.slane %v612, 2
      %v614 = vadd.f32 %v612, %v613
      %v615 = vrot.slane %v614, 1
      %v616 = vadd.f32 %v614, %v615
      %p617 = scmp.eq.s32.totalorder %s22, 0
      // Predicated region
      $region37: #{lambda_loss.1} parent=35 // pred_check
        %p618 = pneg %p617
      $region38: #{lambda_loss.1} parent=35 // pred_check_branch
        %620 = sbr.rel (%p618) target = $region40
      $region39: #{lambda_loss.1} parent=35 // pred_region
        %621 = vst [vmem:[%s301] sm:$0xff] 0.0
        %622 = vst [vmem:[%s305] sm:$0xff] 0.0
      $region40: #{lambda_loss.1} parent=35 // pred_fallthru
        _
      %v623 = vld [vmem:[%s301] sm:$0xff]
      %v624 = vld [vmem:[%s293] sm:$0xff]
      %v625 = vld [vmem:[%s293 + $0x8] sm:$0xff]
      %v626 = vld [vmem:[%s293 + $0x10] sm:$0xff]
      %v627 = vld [vmem:[%s293 + $0x18] sm:$0xff]
      %v628 = vld [vmem:[%s293 + $0x20] sm:$0xff]
      %v629 = vld [vmem:[%s293 + $0x28] sm:$0xff]
      %v630 = vld [vmem:[%s293 + $0x30] sm:$0xff]
      %v631 = vld [vmem:[%s293 + $0x38] sm:$0xff]
      %v632 = vld [vmem:[%s293 + $0x40] sm:$0xff]
      %v633 = vld [vmem:[%s293 + $0x48] sm:$0xff]
      %v634 = vld [vmem:[%s293 + $0x50] sm:$0xff]
      %v635 = vld [vmem:[%s293 + $0x58] sm:$0xff]
      %v636 = vld [vmem:[%s293 + $0x60] sm:$0xff]
      %v637 = vld [vmem:[%s293 + $0x68] sm:$0xff]
      %v638 = vld [vmem:[%s293 + $0x70] sm:$0xff]
      %v639 = vld [vmem:[%s293 + $0x78] sm:$0xff]
      %v640 = vmul.f32 %v565, %v624
      %v641 = vmul.f32 %v567, %v625
      %v642 = vmul.f32 %v569, %v626
      %v643 = vmul.f32 %v571, %v627
      %v644 = vmul.f32 %v573, %v628
      %v645 = vmul.f32 %v575, %v629
      %v646 = vmul.f32 %v577, %v630
      %v647 = vmul.f32 %v579, %v631
      %v648 = vmul.f32 %v581, %v632
      %v649 = vmul.f32 %v583, %v633
      %v650 = vmul.f32 %v585, %v634
      %v651 = vmul.f32 %v587, %v635
      %v652 = vmul.f32 %v589, %v636
      %v653 = vmul.f32 %v591, %v637
      %v654 = vmul.f32 %v593, %v638
      %v655 = vmul.f32 %v595, %v639
      %vm656 = vcmask 7168
      %v657 = vsel %vm656, %v640, 0.0
      %v658 = vsel %vm656, %v641, 0.0
      %v659 = vadd.f32 %v657, %v658
      %v660 = vsel %vm656, %v642, 0.0
      %v661 = vadd.f32 %v659, %v660
      %v662 = vsel %vm656, %v643, 0.0
      %v663 = vadd.f32 %v661, %v662
      %v664 = vsel %vm656, %v644, 0.0
      %v665 = vadd.f32 %v663, %v664
      %v666 = vsel %vm656, %v645, 0.0
      %v667 = vadd.f32 %v665, %v666
      %v668 = vsel %vm656, %v646, 0.0
      %v669 = vadd.f32 %v667, %v668
      %v670 = vsel %vm656, %v647, 0.0
      %v671 = vadd.f32 %v669, %v670
      %v672 = vsel %vm656, %v648, 0.0
      %v673 = vadd.f32 %v671, %v672
      %v674 = vsel %vm656, %v649, 0.0
      %v675 = vadd.f32 %v673, %v674
      %v676 = vsel %vm656, %v650, 0.0
      %v677 = vadd.f32 %v675, %v676
      %v678 = vsel %vm656, %v651, 0.0
      %v679 = vadd.f32 %v677, %v678
      %v680 = vsel %vm656, %v652, 0.0
      %v681 = vadd.f32 %v679, %v680
      %v682 = vsel %vm656, %v653, 0.0
      %v683 = vadd.f32 %v681, %v682
      %v684 = vsel %vm656, %v654, 0.0
      %v685 = vadd.f32 %v683, %v684
      %v686 = vsel %vm656, %v655, 0.0
      %v687 = vadd.f32 %v685, %v686
      %688 = vadd.xlane.f32.xlu0 %v687
      %v689 = vpop.xlane.xlu0 %688
      %v690 = vrot.slane %v689, 4
      %v691 = vadd.f32 %v689, %v690
      %v692 = vrot.slane %v691, 2
      %v693 = vadd.f32 %v691, %v692
      %v694 = vrot.slane %v693, 1
      %v695 = vadd.f32 %v693, %v694
      %s696 = vtos %v695
      %v697 = vstv %s696
      %v698 = vadd.f32 %v623, %v697
      %699 = vst [vmem:[%s301] sm:$0xff] %v698
      %v700 = vld [vmem:[%s305] sm:$0xff]
      %v701 = vld [vmem:[%s297] sm:$0x1]
      %v702 = vmul.f32 %v616, %v701
      %vm703 = vcmask 1040384
      %v704 = vsel %vm703, %v702, 0.0
      %705 = vadd.xlane.f32.xlu0 %v704
      %v706 = vpop.xlane.xlu0 %705
      %v707 = vrot.slane %v706, 4
      %v708 = vadd.f32 %v706, %v707
      %v709 = vrot.slane %v708, 2
      %v710 = vadd.f32 %v708, %v709
      %v711 = vrot.slane %v710, 1
      %v712 = vadd.f32 %v710, %v711
      %s713 = vtos %v712
      %v714 = vstv %s713
      %v715 = vadd.f32 %v700, %v714
      %716 = vst [vmem:[%s305] sm:$0xff] %v715
      %p717 = scmp.lt.s32.totalorder %s21, 1
      %s718 = scalar_select %p717, %s21, 1
      %s719 = smul.addr %s718, 8
      %s720 = scalar_lea.vmem %s4, %s719
      %p721 = scmp.lt.s32.totalorder %s21, 1
      %s722 = scalar_select %p721, %s21, 1
      %s723 = smul.addr %s722, 8
      %s724 = scalar_lea.vmem %s5, %s723
      // Predicated region
      $region41: #{lambda_loss.1} parent=35 // pred_check
        %p725 = pneg %p151
      $region42: #{lambda_loss.1} parent=35 // pred_check_branch
        %727 = sbr.rel (%p725) target = $region44
      $region43: #{lambda_loss.1} parent=35 // pred_region
        _
      $region44: #{lambda_loss.1} parent=35 // pred_fallthru
        _
      // Predicated region
      $region45: #{lambda_loss.1} parent=35 // pred_check
        %p728 = pneg %p177
      $region46: #{lambda_loss.1} parent=35 // pred_check_branch
        %730 = sbr.rel (%p728) target = $region48
      $region47: #{lambda_loss.1} parent=35 // pred_region
        _
      $region48: #{lambda_loss.1} parent=35 // pred_fallthru
        _
    $region36: #{lambda_loss.1} parent=5 // pred_fallthru
      _
    %p731 = scmp.le.s32.totalorder 2, %s12
    // Predicated region
    $region49: #{lambda_loss.1} parent=5 // pred_check
      %p732 = pneg %p731
    $region50: #{lambda_loss.1} parent=5 // pred_check_branch
      %734 = sbr.rel (%p732) target = $region52
    $region51: #{lambda_loss.1} parent=5 // pred_region
      %s735 = ssub.s32 %s12, 2
      // Predicated region
      $region53: #{lambda_loss.1} parent=51 // pred_check
        %p736 = pneg %p157
      $region54: #{lambda_loss.1} parent=51 // pred_check_branch
        %738 = sbr.rel (%p736) target = $region56
      $region55: #{lambda_loss.1} parent=51 // pred_region
        %p739 = scmp.lt.s32.totalorder %s23, 1
        %s740 = scalar_select %p739, %s23, 1
        %s741 = smul.addr %s740, 8
        %s742 = scalar_lea.vmem %s4, %s741
      $region56: #{lambda_loss.1} parent=51 // pred_fallthru
        _
      // Predicated region
      $region57: #{lambda_loss.1} parent=51 // pred_check
        %p743 = pneg %p183
      $region58: #{lambda_loss.1} parent=51 // pred_check_branch
        %745 = sbr.rel (%p743) target = $region60
      $region59: #{lambda_loss.1} parent=51 // pred_region
        %p746 = scmp.lt.s32.totalorder %s23, 1
        %s747 = scalar_select %p746, %s23, 1
        %s748 = smul.addr %s747, 8
        %s749 = scalar_lea.vmem %s5, %s748
      $region60: #{lambda_loss.1} parent=51 // pred_fallthru
        _
    $region52: #{lambda_loss.1} parent=5 // pred_fallthru
      _
  $region6: #{lambda_loss.1} parent=0 // loop_footer
    %s16 = sadd.s32 1, %s12
  $region7: #{lambda_loss.1} parent=0 // loop_footer_branch
    %11 = sbr.rel target = $region3
  $region8: #{lambda_loss.1} parent=0 // loop_exit
    _

</llo_original>
